<compile_context>
chip_gen: v7x
topology: tpu7x:2x2x1
jax: 0.10.0
libtpu: 0.0.40
codegen_flags: <defaults>
</compile_context>

<pallas_src>
import functools

import jax
import jax.numpy as jnp
from jax.experimental import pallas as pl
from jax.experimental.pallas import tpu as pltpu

TEMPERATURE = 2.0
BASE_TEMPERATURE = 0.5
_NEG_INF = -1e30  # finite "minus infinity" used to mask self / padded columns


def _round_up(x, m):
    return ((x + m - 1) // m) * m


def _vmem_cap_bytes():
    """Usable VMEM budget: ~3/4 of physical if queryable, else conservative."""
    try:
        info = pltpu.get_tpu_info()
        cap = getattr(info, "vmem_capacity_bytes", None)
        if cap:
            return int(cap) * 3 // 4
    except Exception:
        pass
    return 48 * 1024 * 1024  # safe on v7x (64 MiB physical) and below


def _supcon_kernel(q_ref, kt_ref, psum_ref, pcnt_ref, valid_ref,   # inputs
                   out_ref,                                        # output
                   qs_sc, m_sc, l_sc,                              # scratch
                   *, inv_temp, loss_scale, n_valid, pad,
                   row_tile, col_tile):
    """One (row_tile x col_tile) step of the online softmax denominator."""
    i = pl.program_id(0)
    j = pl.program_id(1)
    nj = pl.num_programs(1)

    @pl.when(j == 0)
    def _init():
        # 1/T folded into the anchors once per row tile (hoisted out of the
        # column loop), reused by every column step.
        qs_sc[...] = (q_ref[...] * inv_temp).astype(qs_sc.dtype)
        m_sc[...] = jnp.full_like(m_sc, _NEG_INF)   # running row max
        l_sc[...] = jnp.zeros_like(l_sc)            # running sum exp(sim - m)

    # (TR, D) x (D, TC): canonical MXU orientation, f32 accumulation.
    sim = jnp.dot(qs_sc[...], kt_ref[...],
                  preferred_element_type=jnp.float32)        # (TR, TC)

    def _update(s):
        m_prev = m_sc[...]
        m_new = jnp.maximum(m_prev, jnp.max(s, axis=1, keepdims=True))
        alpha = jnp.exp(m_prev - m_new)
        l_sc[...] = alpha * l_sc[...] + jnp.sum(jnp.exp(s - m_new),
                                                axis=1, keepdims=True)
        m_sc[...] = m_new

    row_start = i * row_tile
    col_start = j * col_tile
    # Does this column tile contain any self-pair (diagonal) of this row tile?
    has_diag = jnp.logical_and(row_start < col_start + col_tile,
                               col_start < row_start + row_tile)
    if pad > 0:
        # Padded (zero-feature) columns live only in the trailing column tiles.
        is_special = jnp.logical_or(has_diag, col_start + col_tile > n_valid)
    else:
        is_special = has_diag

    @pl.when(is_special)
    def _masked_step():
        row_ids = row_start + jax.lax.broadcasted_iota(jnp.int32, sim.shape, 0)
        col_ids = col_start + jax.lax.broadcasted_iota(jnp.int32, sim.shape, 1)
        kill = col_ids == row_ids
        if pad > 0:
            kill = jnp.logical_or(kill, col_ids >= n_valid)
        _update(jnp.where(kill, _NEG_INF, sim))

    @pl.when(jnp.logical_not(is_special))
    def _plain_step():
        _update(sim)

    @pl.when(j == nj - 1)
    def _finalize():
        # log of the true denominator sum_{k != i, real} exp(sim_ik).
        log_denom = m_sc[...] + jnp.log(l_sc[...])                 # (TR, 1)
        pcnt = pcnt_ref[...]                                       # (TR, 1)
        # sum over positives j != i of (sim_ij - log_denom_i).
        log_prob_sum = psum_ref[...] - pcnt * log_denom
        mean_lpp = log_prob_sum / jnp.where(pcnt > 0.0, pcnt, 1.0)
        valid = valid_ref[...] > 0.0
        out_ref[:, 0:1] = jnp.where(valid, (-loss_scale) * mean_lpp, 0.0)
        out_ref[:, 1:2] = jnp.where(valid, 1.0, 0.0)


def supcon_loss(features, labels,
                temperature=TEMPERATURE, base_temperature=BASE_TEMPERATURE,
                row_tile=None, col_tile=None, num_classes=None,
                use_bf16_matmul=False):
    """features: [bsz, n_views, ...]; labels: [bsz] integer class ids."""
    bsz, n_views = features.shape[0], features.shape[1]
    assert n_views == 1, (
        "Reference module's label-based filtering / final view() only "
        "supports n_views == 1")
    feats = features.reshape(bsz, n_views, -1).astype(jnp.float32)[:, 0, :]
    n, d = feats.shape
    labels = labels.reshape(-1).astype(jnp.int32)
    inv_temp = 1.0 / float(temperature)

    # --- per-row positive-pair statistics (replaces in-kernel label masking) --
    if num_classes is None:
        num_classes = max(int(jnp.max(labels)) + 1, 1)
    seg = jnp.clip(labels, 0, num_classes - 1)
    class_sum = jax.ops.segment_sum(feats, seg, num_segments=num_classes)
    class_cnt = jax.ops.segment_sum(jnp.ones((n,), jnp.float32), seg,
                                    num_segments=num_classes)
    self_sim = jnp.sum(feats * feats, axis=1)
    # sum_{j != i, label_j == label_i} sim_ij  (raw similarity / T)
    pos_sum = (jnp.sum(feats * class_sum[seg], axis=1) - self_sim) * inv_temp
    pos_cnt = class_cnt[seg] - 1.0
    valid = jnp.logical_and(labels > 0, pos_cnt > 0.0).astype(jnp.float32)

    # --- tile / padding selection --------------------------------------------
    if n <= 8:
        n_pad = 8
    elif n <= 1024:
        n_pad = _round_up(n, 16)
    else:
        n_pad = _round_up(n, 512)

    if n_pad <= 1024:
        def_ct = n_pad
        # >= 2 row programs so the "parallel" axis can shard across v7x's 2 TCs.
        def_rt = n_pad if n_pad <= 8 else n_pad // 2
    else:
        def_ct = 1024 if n_pad % 1024 == 0 else 512
        def_rt = 256
        # keep the double-buffered contrast tile inside a conservative budget
        while def_ct > 128 and 2 * def_ct * d * 4 > 24 * 1024 * 1024:
            def_ct //= 2
    row_tile = def_rt if row_tile is None else row_tile
    col_tile = def_ct if col_tile is None else col_tile
    assert n_pad % row_tile == 0 and row_tile % 8 == 0
    assert n_pad % col_tile == 0 and (col_tile == n_pad or col_tile % 128 == 0)

    pad = n_pad - n
    if pad:
        feats_p = jnp.pad(feats, ((0, pad), (0, 0)))
        pos_sum = jnp.pad(pos_sum, (0, pad))
        pos_cnt = jnp.pad(pos_cnt, (0, pad))
        valid = jnp.pad(valid, (0, pad))
    else:
        feats_p = feats

    # Pre-transpose once: the kernel matmul is (TR, D) x (D, TC), no vxpose.
    contrast_t = feats_p.T
    if use_bf16_matmul:
        contrast_t = contrast_t.astype(jnp.bfloat16)
    qs_dtype = jnp.bfloat16 if use_bf16_matmul else jnp.float32

    pos_sum = pos_sum.reshape(-1, 1)
    pos_cnt = pos_cnt.reshape(-1, 1)
    valid = valid.reshape(-1, 1)

    # --- VMEM budget derived from actual tiles --------------------------------
    k_bytes = 2 if use_bf16_matmul else 4
    est = (2 * row_tile * d * 4              # anchors, double-buffered
           + 2 * d * col_tile * k_bytes      # contrast^T, double-buffered
           + 8 * 2 * row_tile * 4            # per-row stats + packed output
           + row_tile * d * k_bytes          # qs scratch
           + 2 * row_tile * 4                # m / l scratch
           + 4 * row_tile * col_tile * 4)    # sim / exp temporaries headroom
    vmem_limit = int(min(max(est + (8 << 20), 32 << 20), _vmem_cap_bytes()))

    grid = (n_pad // row_tile, n_pad // col_tile)
    kernel = functools.partial(
        _supcon_kernel,
        inv_temp=inv_temp,
        loss_scale=float(temperature) / float(base_temperature),
        n_valid=n, pad=pad, row_tile=row_tile, col_tile=col_tile)

    out = pl.pallas_call(
        kernel,
        out_shape=jax.ShapeDtypeStruct((n_pad, 2), jnp.float32),
        grid_spec=pltpu.PrefetchScalarGridSpec(
            num_scalar_prefetch=0,
            grid=grid,
            in_specs=[
                pl.BlockSpec((row_tile, d), lambda i, j: (i, 0)),   # anchors
                pl.BlockSpec((d, col_tile), lambda i, j: (0, j)),   # contrast^T
                pl.BlockSpec((row_tile, 1), lambda i, j: (i, 0)),   # pos_sum
                pl.BlockSpec((row_tile, 1), lambda i, j: (i, 0)),   # pos_cnt
                pl.BlockSpec((row_tile, 1), lambda i, j: (i, 0)),   # valid
            ],
            out_specs=pl.BlockSpec((row_tile, 2), lambda i, j: (i, 0)),
            scratch_shapes=[
                pltpu.VMEM((row_tile, d), qs_dtype),     # scaled anchors
                pltpu.VMEM((row_tile, 1), jnp.float32),  # running max
                pltpu.VMEM((row_tile, 1), jnp.float32),  # running exp-sum
            ]),
        compiler_params=pltpu.CompilerParams(
            dimension_semantics=("parallel", "arbitrary"),
            vmem_limit_bytes=vmem_limit),
    )(feats_p, contrast_t, pos_sum, pos_cnt, valid)

    # Final scalar reduction (padded / invalid rows contribute exactly 0).
    return jnp.sum(out[:, 0]) / jnp.sum(out[:, 1])


def supcon_loss_ref(features, labels,
                    temperature=TEMPERATURE, base_temperature=BASE_TEMPERATURE):
    """Pure-JAX mirror of the PyTorch forward (n_views == 1)."""
    bsz = features.shape[0]
    contrast = features.reshape(bsz, features.shape[1], -1).astype(jnp.float32)[:, 0, :]
    labels_c = labels.reshape(-1, 1)
    mask = (labels_c == labels_c.T).astype(jnp.float32)
    adc = (contrast @ contrast.T) / temperature
    logits = adc - jnp.max(adc, axis=1, keepdims=True)
    logits_mask = 1.0 - jnp.eye(bsz, dtype=jnp.float32)
    mask = mask * logits_mask
    exp_logits = jnp.exp(logits) * logits_mask
    log_prob = logits - jnp.log(exp_logits.sum(1, keepdims=True))
    mask_sum = mask.sum(1)
    uses = (labels_c[:, 0] > 0) & (mask_sum > 0)
    mlpp = (mask * log_prob).sum(1) / jnp.where(mask_sum > 0, mask_sum, 1.0)
    loss_rows = -(temperature / base_temperature) * mlpp
    return jnp.sum(loss_rows * uses) / jnp.sum(uses)


if __name__ == "__main__":
    key = jax.random.PRNGKey(0)
    k1, k2, k3 = jax.random.split(key, 3)

    # Case 1: bsz=8, n_views=1, C=4, H=8 -> D=32. Single-block path, grid (1,1).
    f1 = jax.random.normal(k1, (8, 1, 4, 8), dtype=jnp.float32)
    l1 = jnp.array([1, 1, 2, 2, 0, 0, 1, 2], dtype=jnp.int32)
    out1 = jax.block_until_ready(supcon_loss(f1, l1))
    ref1 = jax.block_until_ready(supcon_loss_ref(f1, l1))
    assert jnp.allclose(out1, ref1, rtol=1e-5, atol=1e-5), (out1, ref1)

    # Case 2: bsz=12 -> padded to 16 (padding mask path), grid (2, 1): exercises
    # >=2 row programs and the padded-column masking in the special tile.
    f2 = jax.random.normal(k2, (12, 1, 4, 8), dtype=jnp.float32)
    l2 = jnp.array([1, 2, 3, 1, 2, 3, 0, 1, 2, 3, 0, 2], dtype=jnp.int32)
    out2 = jax.block_until_ready(supcon_loss(f2, l2))
    ref2 = jax.block_until_ready(supcon_loss_ref(f2, l2))
    assert jnp.allclose(out2, ref2, rtol=1e-5, atol=1e-5), (out2, ref2)

    # Case 3: bsz=256 with explicit 64x128 tiles -> grid (4, 2): exercises the
    # online (flash-style) column reduction and diag masking in one tile only.
    f3 = jax.random.normal(k3, (256, 1, 4, 8), dtype=jnp.float32)
    l3 = jnp.arange(256, dtype=jnp.int32) % 5
    out3 = jax.block_until_ready(supcon_loss(f3, l3, row_tile=64, col_tile=128))
    ref3 = jax.block_until_ready(supcon_loss_ref(f3, l3))
    # Slightly looser rtol: online-softmax rescaling + segment-sum precompute
    # reorder f32 reductions vs. the dense reference.
    assert jnp.allclose(out3, ref3, rtol=1e-4, atol=1e-5), (out3, ref3)

    print("KERNEL_OK")
</pallas_src>

<mosaic_0001>
module attributes {stable_mosaic.version = 11 : i64} {
  func.func @_supcon_kernel(%arg0: i32, %arg1: i32, %arg2: memref<8x32xf32, #tpu.memory_space<vmem>>, %arg3: memref<32x8xf32, #tpu.memory_space<vmem>>, %arg4: memref<8x1xf32, #tpu.memory_space<vmem>>, %arg5: memref<8x1xf32, #tpu.memory_space<vmem>>, %arg6: memref<8x1xf32, #tpu.memory_space<vmem>>, %arg7: memref<8x2xf32, #tpu.memory_space<vmem>>, %arg8: memref<8x32xf32, #tpu.memory_space<vmem>>, %arg9: memref<8x1xf32, #tpu.memory_space<vmem>>, %arg10: memref<8x1xf32, #tpu.memory_space<vmem>>) attributes {dimension_semantics = [#tpu.dimension_semantics<parallel>, #tpu.dimension_semantics<arbitrary>], iteration_bounds = array<i64: 1, 1>, scalar_prefetch = 0 : i64, scratch_operands = 3 : i64, tpu.core_type = #tpu.core_type<tc>, window_params = [{transform_indices = @transform_0, window_bounds = array<i64: 8, 32>}, {transform_indices = @transform_1, window_bounds = array<i64: 32, 8>}, {transform_indices = @transform_2, window_bounds = array<i64: 8, 1>}, {transform_indices = @transform_3, window_bounds = array<i64: 8, 1>}, {transform_indices = @transform_4, window_bounds = array<i64: 8, 1>}, {transform_indices = @transform_5, window_bounds = array<i64: 8, 2>}]} {
    %c0_i32 = arith.constant 0 : i32
    %0 = arith.cmpi eq, %arg1, %c0_i32 : i32
    %1 = arith.extui %0 : i1 to i32
    %c0_i32_0 = arith.constant 0 : i32
    %2 = arith.cmpi ne, %1, %c0_i32_0 : i32
    scf.if %2 {
      %c0_11 = arith.constant 0 : index
      %c0_12 = arith.constant 0 : index
      %21 = vector.load %arg2[%c0_11, %c0_12] : memref<8x32xf32, #tpu.memory_space<vmem>>, vector<8x32xf32>
      %cst_13 = arith.constant 5.000000e-01 : f32
      %22 = vector.broadcast %cst_13 : f32 to vector<8x32xf32>
      %23 = arith.mulf %21, %22 : vector<8x32xf32>
      %c0_14 = arith.constant 0 : index
      %c0_15 = arith.constant 0 : index
      %24 = vector.load %arg8[%c0_14, %c0_15] : memref<8x32xf32, #tpu.memory_space<vmem>>, vector<8x32xf32>
      tpu.vector_store %arg8[%c0_14, %c0_15], %23 {strides = array<i32>} : memref<8x32xf32, #tpu.memory_space<vmem>>, vector<8x32xf32>,
      %cst_16 = arith.constant -1.000000e+30 : f32
      %25 = vector.broadcast %cst_16 : f32 to vector<8x1xf32>
      %c0_17 = arith.constant 0 : index
      %c0_18 = arith.constant 0 : index
      %26 = vector.load %arg9[%c0_17, %c0_18] : memref<8x1xf32, #tpu.memory_space<vmem>>, vector<8x1xf32>
      tpu.vector_store %arg9[%c0_17, %c0_18], %25 {strides = array<i32>} : memref<8x1xf32, #tpu.memory_space<vmem>>, vector<8x1xf32>,
      %cst_19 = arith.constant 0.000000e+00 : f32
      %27 = vector.broadcast %cst_19 : f32 to vector<8x1xf32>
      %c0_20 = arith.constant 0 : index
      %c0_21 = arith.constant 0 : index
      %28 = vector.load %arg10[%c0_20, %c0_21] : memref<8x1xf32, #tpu.memory_space<vmem>>, vector<8x1xf32>
      tpu.vector_store %arg10[%c0_20, %c0_21], %27 {strides = array<i32>} : memref<8x1xf32, #tpu.memory_space<vmem>>, vector<8x1xf32>,
    } else {
    }
    %c0 = arith.constant 0 : index
    %c0_1 = arith.constant 0 : index
    %3 = vector.load %arg8[%c0, %c0_1] : memref<8x32xf32, #tpu.memory_space<vmem>>, vector<8x32xf32>
    %c0_2 = arith.constant 0 : index
    %c0_3 = arith.constant 0 : index
    %4 = vector.load %arg3[%c0_2, %c0_3] : memref<32x8xf32, #tpu.memory_space<vmem>>, vector<32x8xf32>
    %cst = arith.constant dense<0.000000e+00> : vector<8x8xf32>
    %5 = tpu.matmul %3, %4, %cst {dimension_numbers = #tpu.dot_dimension_numbers<[1], [0], [0], [1], [0, 0, 1, 1], [], []>} : vector<8x32xf32>, vector<32x8xf32>, vector<8x8xf32> -> vector<8x8xf32>
    %c8_i32 = arith.constant 8 : i32
    %6 = arith.muli %arg0, %c8_i32 : i32
    %c8_i32_4 = arith.constant 8 : i32
    %7 = arith.muli %arg1, %c8_i32_4 : i32
    %c8_i32_5 = arith.constant 8 : i32
    %8 = arith.addi %7, %c8_i32_5 : i32
    %9 = arith.cmpi slt, %6, %8 : i32
    %c8_i32_6 = arith.constant 8 : i32
    %10 = arith.addi %6, %c8_i32_6 : i32
    %11 = arith.cmpi slt, %7, %10 : i32
    %12 = arith.andi %9, %11 : i1
    %13 = arith.extui %12 : i1 to i32
    %c0_i32_7 = arith.constant 0 : i32
    %14 = arith.cmpi ne, %13, %c0_i32_7 : i32
    scf.if %14 {
      %21 = tpu.iota {dimensions = array<i32: 0>} : vector<8x8xi32>
      %22 = vector.broadcast %6 : i32 to vector<8x8xi32>
      %23 = arith.addi %22, %21 : vector<8x8xi32>
      %24 = tpu.iota {dimensions = array<i32: 1>} : vector<8x8xi32>
      %25 = vector.broadcast %7 : i32 to vector<8x8xi32>
      %26 = arith.addi %25, %24 : vector<8x8xi32>
      %27 = arith.cmpi eq, %26, %23 : vector<8x8xi32>
      %cst_11 = arith.constant -1.000000e+30 : f32
      %28 = vector.broadcast %cst_11 : f32 to vector<8x8xf32>
      %29 = arith.select %27, %28, %5 : vector<8x8xi1>, vector<8x8xf32>
      %c0_12 = arith.constant 0 : index
      %c0_13 = arith.constant 0 : index
      %30 = vector.load %arg9[%c0_12, %c0_13] : memref<8x1xf32, #tpu.memory_space<vmem>>, vector<8x1xf32>
      %cst_14 = arith.constant dense<0xFF800000> : vector<8xf32>
      %31 = vector.multi_reduction <maximumf>, %29, %cst_14 [1] : vector<8x8xf32> to vector<8xf32>
      %32 = vector.shape_cast %31 : vector<8xf32> to vector<8x1xf32>
      %33 = arith.maximumf %30, %32 : vector<8x1xf32>
      %34 = arith.subf %30, %33 : vector<8x1xf32>
      %35 = math.exp %34 : vector<8x1xf32>
      %c0_15 = arith.constant 0 : index
      %c0_16 = arith.constant 0 : index
      %36 = vector.load %arg10[%c0_15, %c0_16] : memref<8x1xf32, #tpu.memory_space<vmem>>, vector<8x1xf32>
      %37 = arith.mulf %35, %36 : vector<8x1xf32>
      %38 = vector.broadcast %33 : vector<8x1xf32> to vector<8x8xf32>
      %39 = arith.subf %29, %38 : vector<8x8xf32>
      %40 = math.exp %39 : vector<8x8xf32>
      %cst_17 = arith.constant dense<0.000000e+00> : vector<8xf32>
      %41 = vector.multi_reduction <add>, %40, %cst_17 [1] : vector<8x8xf32> to vector<8xf32>
      %42 = vector.shape_cast %41 : vector<8xf32> to vector<8x1xf32>
      %43 = arith.addf %37, %42 : vector<8x1xf32>
      %c0_18 = arith.constant 0 : index
      %c0_19 = arith.constant 0 : index
      %44 = vector.load %arg10[%c0_18, %c0_19] : memref<8x1xf32, #tpu.memory_space<vmem>>, vector<8x1xf32>
      tpu.vector_store %arg10[%c0_18, %c0_19], %43 {strides = array<i32>} : memref<8x1xf32, #tpu.memory_space<vmem>>, vector<8x1xf32>,
      %c0_20 = arith.constant 0 : index
      %c0_21 = arith.constant 0 : index
      %45 = vector.load %arg9[%c0_20, %c0_21] : memref<8x1xf32, #tpu.memory_space<vmem>>, vector<8x1xf32>
      tpu.vector_store %arg9[%c0_20, %c0_21], %33 {strides = array<i32>} : memref<8x1xf32, #tpu.memory_space<vmem>>, vector<8x1xf32>,
    } else {
    }
    %true = arith.constant true
    %15 = arith.xori %12, %true : i1
    %16 = arith.extui %15 : i1 to i32
    %c0_i32_8 = arith.constant 0 : i32
    %17 = arith.cmpi ne, %16, %c0_i32_8 : i32
    scf.if %17 {
      %c0_11 = arith.constant 0 : index
      %c0_12 = arith.constant 0 : index
      %21 = vector.load %arg9[%c0_11, %c0_12] : memref<8x1xf32, #tpu.memory_space<vmem>>, vector<8x1xf32>
      %cst_13 = arith.constant dense<0xFF800000> : vector<8xf32>
      %22 = vector.multi_reduction <maximumf>, %5, %cst_13 [1] : vector<8x8xf32> to vector<8xf32>
      %23 = vector.shape_cast %22 : vector<8xf32> to vector<8x1xf32>
      %24 = arith.maximumf %21, %23 : vector<8x1xf32>
      %25 = arith.subf %21, %24 : vector<8x1xf32>
      %26 = math.exp %25 : vector<8x1xf32>
      %c0_14 = arith.constant 0 : index
      %c0_15 = arith.constant 0 : index
      %27 = vector.load %arg10[%c0_14, %c0_15] : memref<8x1xf32, #tpu.memory_space<vmem>>, vector<8x1xf32>
      %28 = arith.mulf %26, %27 : vector<8x1xf32>
      %29 = vector.broadcast %24 : vector<8x1xf32> to vector<8x8xf32>
      %30 = arith.subf %5, %29 : vector<8x8xf32>
      %31 = math.exp %30 : vector<8x8xf32>
      %cst_16 = arith.constant dense<0.000000e+00> : vector<8xf32>
      %32 = vector.multi_reduction <add>, %31, %cst_16 [1] : vector<8x8xf32> to vector<8xf32>
      %33 = vector.shape_cast %32 : vector<8xf32> to vector<8x1xf32>
      %34 = arith.addf %28, %33 : vector<8x1xf32>
      %c0_17 = arith.constant 0 : index
      %c0_18 = arith.constant 0 : index
      %35 = vector.load %arg10[%c0_17, %c0_18] : memref<8x1xf32, #tpu.memory_space<vmem>>, vector<8x1xf32>
      tpu.vector_store %arg10[%c0_17, %c0_18], %34 {strides = array<i32>} : memref<8x1xf32, #tpu.memory_space<vmem>>, vector<8x1xf32>,
      %c0_19 = arith.constant 0 : index
      %c0_20 = arith.constant 0 : index
      %36 = vector.load %arg9[%c0_19, %c0_20] : memref<8x1xf32, #tpu.memory_space<vmem>>, vector<8x1xf32>
      tpu.vector_store %arg9[%c0_19, %c0_20], %24 {strides = array<i32>} : memref<8x1xf32, #tpu.memory_space<vmem>>, vector<8x1xf32>,
    } else {
    }
    %c0_i32_9 = arith.constant 0 : i32
    %18 = arith.cmpi eq, %arg1, %c0_i32_9 : i32
    %19 = arith.extui %18 : i1 to i32
    %c0_i32_10 = arith.constant 0 : i32
    %20 = arith.cmpi ne, %19, %c0_i32_10 : i32
    scf.if %20 {
      %c0_11 = arith.constant 0 : index
      %c0_12 = arith.constant 0 : index
      %21 = vector.load %arg9[%c0_11, %c0_12] : memref<8x1xf32, #tpu.memory_space<vmem>>, vector<8x1xf32>
      %c0_13 = arith.constant 0 : index
      %c0_14 = arith.constant 0 : index
      %22 = vector.load %arg10[%c0_13, %c0_14] : memref<8x1xf32, #tpu.memory_space<vmem>>, vector<8x1xf32>
      %23 = math.log %22 : vector<8x1xf32>
      %24 = arith.addf %21, %23 : vector<8x1xf32>
      %c0_15 = arith.constant 0 : index
      %c0_16 = arith.constant 0 : index
      %25 = vector.load %arg5[%c0_15, %c0_16] : memref<8x1xf32, #tpu.memory_space<vmem>>, vector<8x1xf32>
      %c0_17 = arith.constant 0 : index
      %c0_18 = arith.constant 0 : index
      %26 = vector.load %arg4[%c0_17, %c0_18] : memref<8x1xf32, #tpu.memory_space<vmem>>, vector<8x1xf32>
      %27 = arith.mulf %25, %24 : vector<8x1xf32>
      %28 = arith.subf %26, %27 : vector<8x1xf32>
      %cst_19 = arith.constant 0.000000e+00 : f32
      %29 = vector.broadcast %cst_19 : f32 to vector<8x1xf32>
      %30 = arith.cmpf ogt, %25, %29 : vector<8x1xf32>
      %cst_20 = arith.constant 1.000000e+00 : f32
      %31 = vector.broadcast %cst_20 : f32 to vector<8x1xf32>
      %32 = arith.select %30, %25, %31 : vector<8x1xi1>, vector<8x1xf32>
      %33 = arith.divf %28, %32 : vector<8x1xf32>
      %c0_21 = arith.constant 0 : index
      %c0_22 = arith.constant 0 : index
      %34 = vector.load %arg6[%c0_21, %c0_22] : memref<8x1xf32, #tpu.memory_space<vmem>>, vector<8x1xf32>
      %cst_23 = arith.constant 0.000000e+00 : f32
      %35 = vector.broadcast %cst_23 : f32 to vector<8x1xf32>
      %36 = arith.cmpf ogt, %34, %35 : vector<8x1xf32>
      %cst_24 = arith.constant -4.000000e+00 : f32
      %37 = vector.broadcast %cst_24 : f32 to vector<8x1xf32>
      %38 = arith.mulf %37, %33 : vector<8x1xf32>
      %cst_25 = arith.constant 0.000000e+00 : f32
      %39 = vector.broadcast %cst_25 : f32 to vector<8x1xf32>
      %40 = arith.select %36, %38, %39 : vector<8x1xi1>, vector<8x1xf32>
      %c0_26 = arith.constant 0 : index
      %c0_27 = arith.constant 0 : index
      %41 = vector.load %arg7[%c0_26, %c0_27] : memref<8x2xf32, #tpu.memory_space<vmem>>, vector<8x1xf32>
      tpu.vector_store %arg7[%c0_26, %c0_27], %40 {strides = array<i32>} : memref<8x2xf32, #tpu.memory_space<vmem>>, vector<8x1xf32>,
      %cst_28 = arith.constant 1.000000e+00 : f32
      %cst_29 = arith.constant 0.000000e+00 : f32
      %42 = vector.broadcast %cst_28 : f32 to vector<8x1xf32>
      %43 = vector.broadcast %cst_29 : f32 to vector<8x1xf32>
      %44 = arith.select %36, %42, %43 : vector<8x1xi1>, vector<8x1xf32>
      %c0_30 = arith.constant 0 : index
      %c1 = arith.constant 1 : index
      %45 = vector.load %arg7[%c0_30, %c1] : memref<8x2xf32, #tpu.memory_space<vmem>>, vector<8x1xf32>
      tpu.vector_store %arg7[%c0_30, %c1], %44 {strides = array<i32>} : memref<8x2xf32, #tpu.memory_space<vmem>>, vector<8x1xf32>,
    } else {
    }
    return
  }
  func.func @transform_0(%arg0: i32, %arg1: i32) -> (i32, i32) {
    %c0_i32 = arith.constant 0 : i32
    %c0_i32_0 = arith.constant 0 : i32
    return %arg0, %c0_i32 : i32, i32
  }
  func.func @transform_1(%arg0: i32, %arg1: i32) -> (i32, i32) {
    %c0_i32 = arith.constant 0 : i32
    %c0_i32_0 = arith.constant 0 : i32
    return %c0_i32, %arg1 : i32, i32
  }
  func.func @transform_2(%arg0: i32, %arg1: i32) -> (i32, i32) {
    %c0_i32 = arith.constant 0 : i32
    %c0_i32_0 = arith.constant 0 : i32
    return %arg0, %c0_i32 : i32, i32
  }
  func.func @transform_3(%arg0: i32, %arg1: i32) -> (i32, i32) {
    %c0_i32 = arith.constant 0 : i32
    %c0_i32_0 = arith.constant 0 : i32
    return %arg0, %c0_i32 : i32, i32
  }
  func.func @transform_4(%arg0: i32, %arg1: i32) -> (i32, i32) {
    %c0_i32 = arith.constant 0 : i32
    %c0_i32_0 = arith.constant 0 : i32
    return %arg0, %c0_i32 : i32, i32
  }
  func.func @transform_5(%arg0: i32, %arg1: i32) -> (i32, i32) {
    %c0_i32 = arith.constant 0 : i32
    %c0_i32_0 = arith.constant 0 : i32
    return %arg0, %c0_i32 : i32, i32
  }
}

</mosaic_0001>

<llo_original>
// kernel: tpu_custom_call.1
$region0: #{tpu_custom_call.1}
  #allocation0 [shape = 'u32[]', space=smem, size = 0x4, offset = 0x4, fixed_abs, tag = 'smem constant byte address 0x4 - core index']
  #allocation1 [shape = 'u32[144,128]{1,0:T(1,128)}', space=vmem, size = 0x12000, scoped, tag = 'internal scratch']
  #allocation2 [shape = 'f32[8,32]{1,0:T(8,128)}', space=vmem, size = 0x1000, scoped, tag = 'scratch operand']
  #allocation3 [shape = 'f32[8,1]{1,0:T(8,128)}', space=vmem, size = 0x1000, scoped, tag = 'scratch operand']
  #allocation4 [shape = 'f32[8,1]{1,0:T(8,128)}', space=vmem, size = 0x1000, scoped, tag = 'scratch operand']
  %s0 = inlined_call_operand.vmem [shape: f32[8,32], index: 0, kind: input, shape index: {}]
  %s1 = inlined_call_operand.vmem [shape: f32[32,8], index: 1, kind: input, shape index: {}]
  %s2 = inlined_call_operand.vmem [shape: f32[8,1], index: 2, kind: input, shape index: {}]
  %s3 = inlined_call_operand.vmem [shape: f32[8,1], index: 3, kind: input, shape index: {}]
  %s4 = inlined_call_operand.vmem [shape: f32[8,1], index: 4, kind: input, shape index: {}]
  %s5 = inlined_call_operand.vmem [shape: f32[8,2], index: 5, kind: output, shape index: {}]
  %s6 = sld [smem:[#allocation0]]
  $region46: #{tpu_custom_call.1} parent=0
    _
  %s8 = ssub.s32 1, %s6
  %s9 = scalar_select 0, %s8, %s6
  // Predicated region
  $region2: #{tpu_custom_call.1} parent=0 // pred_check
    _
  $region3: #{tpu_custom_call.1} parent=0 // pred_check_branch
    %11 = sbr.rel (0) target = $region5
  $region4: #{tpu_custom_call.1} parent=0 // pred_region
    _
  $region5: #{tpu_custom_call.1} parent=0 // pred_fallthru
    _
  // Predicated region
  $region6: #{tpu_custom_call.1} parent=0 // pred_check
    _
  $region7: #{tpu_custom_call.1} parent=0 // pred_check_branch
    %13 = sbr.rel (0) target = $region9
  $region8: #{tpu_custom_call.1} parent=0 // pred_region
    _
  $region9: #{tpu_custom_call.1} parent=0 // pred_fallthru
    _
  // Predicated region
  $region10: #{tpu_custom_call.1} parent=0 // pred_check
    _
  $region11: #{tpu_custom_call.1} parent=0 // pred_check_branch
    %15 = sbr.rel (0) target = $region13
  $region12: #{tpu_custom_call.1} parent=0 // pred_region
    _
  $region13: #{tpu_custom_call.1} parent=0 // pred_fallthru
    _
  // Predicated region
  $region14: #{tpu_custom_call.1} parent=0 // pred_check
    _
  $region15: #{tpu_custom_call.1} parent=0 // pred_check_branch
    %17 = sbr.rel (0) target = $region17
  $region16: #{tpu_custom_call.1} parent=0 // pred_region
    _
  $region17: #{tpu_custom_call.1} parent=0 // pred_fallthru
    _
  // Predicated region
  $region18: #{tpu_custom_call.1} parent=0 // pred_check
    _
  $region19: #{tpu_custom_call.1} parent=0 // pred_check_branch
    %19 = sbr.rel (0) target = $region21
  $region20: #{tpu_custom_call.1} parent=0 // pred_region
    _
  $region21: #{tpu_custom_call.1} parent=0 // pred_fallthru
    _
  %p20 = scmp.eq.s32.totalorder 0, 0
  // Predicated region
  $region22: #{tpu_custom_call.1} parent=0 // pred_check
    %p21 = pneg %p20
  $region23: #{tpu_custom_call.1} parent=0 // pred_check_branch
    %23 = sbr.rel (%p21) target = $region25
  $region24: #{tpu_custom_call.1} parent=0 // pred_region
    %v24 = vld [vmem:[%s0] sm:$0xff]
    %v25 = vmul.f32 %v24, 0.5
    %vm26 = vcmask 261120
    %27 = vst.msk [vmem:[#allocation2] sm:$0xff] %vm26, %v25
    %vm28 = vcmask 7168
    %29 = vst.msk [vmem:[#allocation3] sm:$0xff] %vm28, -1e+30
    %30 = vst.msk [vmem:[#allocation4] sm:$0xff] %vm28, 0.0
  $region25: #{tpu_custom_call.1} parent=0 // pred_fallthru
    _
  %v31 = vld [vmem:[#allocation2] sm:$0xff]
  %v32 = vld [vmem:[%s1] sm:$0xff]
  %v33 = vld [vmem:[%s1 + $0x8] sm:$0xff]
  %v34 = vld [vmem:[%s1 + $0x10] sm:$0xff]
  %v35 = vld [vmem:[%s1 + $0x18] sm:$0xff]
  %vm36 = vcmask 261120
  %v38 = vsel %vm36, %v31, 0
  %40 = vmatprep.subr.mxu0 0.0
  %41 = vmatpush1.msra.mxu0 %v32
  %42 = vmatprep.subr.mxu0 0.0
  %43 = vmatpush1.msra.mxu0 %v33
  %44 = vmatprep.subr.mxu0 0.0
  %45 = vmatpush1.msra.mxu0 %v34
  %46 = vmatprep.subr.mxu0 0.0
  %47 = vmatpush1.msra.mxu0 %v35
  %48 = vmatprep.subr.mxu0 0.0
  %49 = vmatpush1.msra.mxu0 0.0
  %50 = vmatprep.subr.mxu0 0.0
  %51 = vmatpush1.msra.mxu0 0.0
  %52 = vmatprep.subr.mxu0 0.0
  %53 = vmatpush1.msra.mxu0 0.0
  %54 = vmatprep.subr.mxu0 0.0
  %55 = vmatpush1.msra.mxu0 0.0
  %56 = vmatprep.subr.mxu0 0.0
  %57 = vmatpush1.msra.mxu0 0.0
  %58 = vmatprep.subr.mxu0 0.0
  %59 = vmatpush1.msra.mxu0 0.0
  %60 = vmatprep.subr.mxu0 0.0
  %61 = vmatpush1.msra.mxu0 0.0
  %62 = vmatprep.subr.mxu0 0.0
  %63 = vmatpush1.msra.mxu0 0.0
  %64 = vmatprep.subr.mxu0 0.0
  %65 = vmatpush1.msra.mxu0 0.0
  %66 = vmatprep.subr.mxu0 0.0
  %67 = vmatpush1.msra.mxu0 0.0
  %68 = vmatprep.subr.mxu0 0.0
  %69 = vmatpush1.msra.mxu0 0.0
  %70 = vmatprep.subr.mxu0 0.0
  %71 = vmatpush1.msra.mxu0 0.0
  %72 = vmatprep.subr.mxu0 0.0
  %73 = vmatpush1.msra.mxu0 0.0
  %74 = vmatprep.subr.mxu0 0.0
  %75 = vmatpush1.msra.mxu0 0.0
  %76 = vmatprep.subr.mxu0 0.0
  %77 = vmatpush1.msra.mxu0 0.0
  %78 = vmatprep.subr.mxu0 0.0
  %79 = vmatpush1.msra.mxu0 0.0
  %80 = vmatprep.subr.mxu0 0.0
  %81 = vmatpush1.msra.mxu0 0.0
  %82 = vmatprep.subr.mxu0 0.0
  %83 = vmatpush1.msra.mxu0 0.0
  %84 = vmatprep.subr.mxu0 0.0
  %85 = vmatpush1.msra.mxu0 0.0
  %86 = vmatprep.subr.mxu0 0.0
  %87 = vmatpush1.msra.mxu0 0.0
  %88 = vmatprep.subr.mxu0 0.0
  %89 = vmatpush1.msra.mxu0 0.0
  %90 = vmatprep.subr.mxu0 0.0
  %91 = vmatpush1.msra.mxu0 0.0
  %92 = vmatprep.subr.mxu0 0.0
  %93 = vmatpush1.msra.mxu0 0.0
  %94 = vmatprep.subr.mxu0 0.0
  %95 = vmatpush1.msra.mxu0 0.0
  %96 = vmatprep.subr.mxu0 0.0
  %97 = vmatpush1.msra.mxu0 0.0
  %98 = vmatprep.subr.mxu0 0.0
  %99 = vmatpush1.msra.mxu0 0.0
  %100 = vmatprep.subr.mxu0 0.0
  %101 = vmatpush1.msra.mxu0 0.0
  %102 = vmatprep.subr.mxu0 0.0
  %103 = vmatpush1.msra.mxu0 0.0
  %104 = vmatprep.mubr.f32.mxu0 0.0
  %105 = vmatmul.mubr.f32.gmra.mrb[0].mxu0 %v38
  %v106 = vpop.f32.mrb[0].mxu0
  %v107 = vadd.f32 0.0, %v106
  %v108 = vpop.f32.mrb[0].mxu0
  %109 = vdwg.mxu0
  %s110 = smul.u32 0, 8
  %s111 = smul.u32 0, 8
  %s112 = sadd.s32 %s111, 8
  %p113 = scmp.lt.s32.totalorder %s110, %s112
  %s114 = sadd.s32 %s110, 8
  %p115 = scmp.lt.s32.totalorder %s111, %s114
  %p116 = pnand %p113, %p115
  %p117 = pneg %p116
  // Predicated region
  $region26: #{tpu_custom_call.1} parent=0 // pred_check
    _
  $region27: #{tpu_custom_call.1} parent=0 // pred_check_branch
    %119 = sbr.rel (%p116) target = $region29
  $region28: #{tpu_custom_call.1} parent=0 // pred_region
    %v120 = vlaneseq
    %v121 = vshrl.u32 %v120, 7
    %v122 = vstv %s110
    %v123 = vadd.s32 %v122, %v121
    %v124 = vlaneseq
    %v125 = vand.u32 %v124, 127
    %v126 = vstv %s111
    %v127 = vadd.s32 %v126, %v125
    %vm128 = vcmp.eq.s32.totalorder %v127, %v123
    %v129 = vsel %vm128, -1e+30, %v107
    %v130 = vld [vmem:[#allocation3] sm:$0xff]
    %vm131 = vcmask 64512
    %v132 = vsel %vm131, %v129, -inf
    %133 = vmax.xlane.f32.xlu0 %v132
    %v134 = vpop.xlane.xlu0 %133
    %v135 = vmax.f32 %v130, %v134
    %v136 = vsub.f32 %v130, %v135
    %v137 = vmul.f32 %v136, 1.442695
    %v138 = vpow.pop %v137
    %v139 = vld [vmem:[#allocation4] sm:$0xff]
    %v140 = vmul.f32 %v138, %v139
    %142 = vset.pattern.permute.xlu0 0
    %143 = vperm.xlu0 %142, %v135
    %v144 = vpop.permute.xlu0 %143
    %v146 = vsub.f32 %v129, %v144
    %v147 = vmul.f32 %v146, 1.442695
    %v148 = vpow.pop %v147
    %v149 = vsel %vm131, %v148, 0.0
    %150 = vadd.xlane.f32.xlu0 %v149
    %v151 = vpop.xlane.xlu0 %150
    %v152 = vadd.f32 %v140, %v151
    %vm153 = vcmask 7168
    %154 = vst.msk [vmem:[#allocation4] sm:$0xff] %vm153, %v152
    %155 = vst.msk [vmem:[#allocation3] sm:$0xff] %vm153, %v135
  $region29: #{tpu_custom_call.1} parent=0 // pred_fallthru
    _
  %p156 = pneg %p117
  // Predicated region
  $region30: #{tpu_custom_call.1} parent=0 // pred_check
    _
  $region31: #{tpu_custom_call.1} parent=0 // pred_check_branch
    %158 = sbr.rel (%p117) target = $region33
  $region32: #{tpu_custom_call.1} parent=0 // pred_region
    %v159 = vld [vmem:[#allocation3] sm:$0xff]
    %vm160 = vcmask 64512
    %v161 = vsel %vm160, %v107, -inf
    %162 = vmax.xlane.f32.xlu0 %v161
    %v163 = vpop.xlane.xlu0 %162
    %v164 = vmax.f32 %v159, %v163
    %v165 = vsub.f32 %v159, %v164
    %v166 = vmul.f32 %v165, 1.442695
    %v167 = vpow.pop %v166
    %v168 = vld [vmem:[#allocation4] sm:$0xff]
    %v169 = vmul.f32 %v167, %v168
    %171 = vset.pattern.permute.xlu0 0
    %172 = vperm.xlu0 %171, %v164
    %v173 = vpop.permute.xlu0 %172
    %v175 = vsub.f32 %v107, %v173
    %v176 = vmul.f32 %v175, 1.442695
    %v177 = vpow.pop %v176
    %v178 = vsel %vm160, %v177, 0.0
    %179 = vadd.xlane.f32.xlu0 %v178
    %v180 = vpop.xlane.xlu0 %179
    %v181 = vadd.f32 %v169, %v180
    %vm182 = vcmask 7168
    %183 = vst.msk [vmem:[#allocation4] sm:$0xff] %vm182, %v181
    %184 = vst.msk [vmem:[#allocation3] sm:$0xff] %vm182, %v164
  $region33: #{tpu_custom_call.1} parent=0 // pred_fallthru
    _
  // Predicated region
  $region34: #{tpu_custom_call.1} parent=0 // pred_check
    %p185 = pneg %p20
  $region35: #{tpu_custom_call.1} parent=0 // pred_check_branch
    %187 = sbr.rel (%p185) target = $region37
  $region36: #{tpu_custom_call.1} parent=0 // pred_region
    %v188 = vld [vmem:[#allocation3] sm:$0xff]
    %v189 = vld [vmem:[#allocation4] sm:$0xff]
    %v190 = vlog2.pop %v189
    %v191 = vmul.f32 %v190, 0.6931472
    %v192 = vadd.f32 %v188, %v191
    %v193 = vld [vmem:[%s3] sm:$0xff]
    %v194 = vld [vmem:[%s2] sm:$0xff]
    %v195 = vmul.f32 %v193, %v192
    %v196 = vsub.f32 %v194, %v195
    %vm197 = vcmp.gt.f32.partialorder %v193, 0.0
    %v198 = vsel %vm197, %v193, 1.0
    %v199 = vrcp.pop %v198
    %v200 = vmul.f32 %v196, %v199
    %v201 = vld [vmem:[%s4] sm:$0xff]
    %vm202 = vcmp.gt.f32.partialorder %v201, 0.0
    %v203 = vmul.f32 %v200, -4.0
    %v204 = vsel %vm202, %v203, 0.0
    %vm205 = vcmask 7168
    %206 = vst.msk [vmem:[%s5] sm:$0xff] %vm205, %v204
    %v207 = vsel %vm202, 1.0, 0.0
    %209 = vrot.lane.b32.xlu0 %v207, 1
    %v210 = vpop.permute.xlu0 %209
    %vm212 = vcmask 15368
    %213 = vst.msk [vmem:[%s5] sm:$0xff] %vm212, %v210
  $region37: #{tpu_custom_call.1} parent=0 // pred_fallthru
    _
  // Predicated region
  $region38: #{tpu_custom_call.1} parent=0 // pred_check
    _
  $region39: #{tpu_custom_call.1} parent=0 // pred_check_branch
    %215 = sbr.rel (0) target = $region41
  $region40: #{tpu_custom_call.1} parent=0 // pred_region
    _
  $region41: #{tpu_custom_call.1} parent=0 // pred_fallthru
    _
  // Predicated region
  $region42: #{tpu_custom_call.1} parent=0 // pred_check
    _
  $region43: #{tpu_custom_call.1} parent=0 // pred_check_branch
    %217 = sbr.rel (0) target = $region45
  $region44: #{tpu_custom_call.1} parent=0 // pred_region
    _
  $region45: #{tpu_custom_call.1} parent=0 // pred_fallthru
    _

</llo_original>
